<compile_context>
chip_gen: v5e
topology: v5e:2x2
jax: 0.10.0
libtpu: 0.0.40
codegen_flags: <defaults>
</compile_context>

<pallas_src>
import math

import jax
import jax.numpy as jnp
from jax.experimental import pallas as pl
from jax.experimental.pallas import tpu as pltpu


def _copy_kernel(x_ref, o_ref):
    # Pure elementwise pass-through of the VMEM tile.
    o_ref[...] = x_ref[...]


def _min_sublanes(dtype) -> int:
    # (8,128) is the native 32-bit tile; sub-32-bit dtypes pack along sublanes
    # (bf16 -> 16, int8 -> 32).  Guard sub-byte dtypes at >= 32.
    itemsize = jnp.dtype(dtype).itemsize
    return max(8, 32 // max(int(itemsize), 1))


def _device_kind() -> str:
    try:
        return jax.devices()[0].device_kind.lower()
    except Exception:  # pragma: no cover - defensive
        return ""


_KIND = _device_kind()
# Per-block byte budget: 2 MiB on v5e (2 refs x 2 bufs x 2 MiB = 8 MiB < 16 MiB
# scoped default), 4 MiB elsewhere (16 MiB < 32 MiB scoped default on v6e/v7x).
_BLOCK_BYTES = (2 << 20) if "v5" in _KIND else (4 << 20)
_IS_V7 = "v7" in _KIND


def _grid_semantics():
    # Only CORE_PARALLEL actually changes codegen; use it where there are two
    # TensorCores (v7x).  Plain "parallel" is a safe no-op elsewhere.
    return (pltpu.CORE_PARALLEL,) if _IS_V7 else ("parallel",)


@jax.jit
def _pallas_identity(x: jax.Array) -> jax.Array:
    """Identity copy of `x` routed through a Pallas TPU kernel (fresh output)."""
    shape = x.shape
    dtype = x.dtype
    itemsize = jnp.dtype(dtype).itemsize
    total = math.prod(shape) if shape else 1
    if total == 0:
        return x

    total_bytes = total * itemsize

    # ---- Small-input fast path: one whole-array block, grid=(), no padding.
    if total_bytes <= _BLOCK_BYTES:
        if total % 128 == 0:
            x2d = x.reshape(total // 128, 128)        # lane-dense view
        else:
            x2d = x.reshape(1, total)                 # full-dims block is exempt
        out = pl.pallas_call(
            _copy_kernel,
            out_shape=jax.ShapeDtypeStruct(x2d.shape, dtype),
            cost_estimate=pl.CostEstimate(
                flops=0, transcendentals=0, bytes_accessed=2 * total_bytes),
        )(x2d)
        return out.reshape(shape)

    # ---- Large-input path: lane-dense 2-D tiling + pipelined grid.
    min_sub = _min_sublanes(dtype)
    lanes = next((w for w in (1024, 512, 256, 128) if total % w == 0), None)

    flat = x.reshape(-1)
    padded_total = total
    if lanes is None:
        # TODO(synk): misaligned flat size -> jnp.pad is a full-array XLA copy;
        # only reachable on the test-only force_kernel path for awkward sizes.
        lanes = 128
        padded_total = pl.cdiv(total, lanes) * lanes
        flat = jnp.pad(flat, (0, padded_total - total))

    rows = padded_total // lanes
    x2d = flat.reshape(rows, lanes)

    tile_rows = _BLOCK_BYTES // (lanes * itemsize)
    tile_rows = max(min_sub, (tile_rows // min_sub) * min_sub)
    rows_floor = max(min_sub, (rows // min_sub) * min_sub)
    tile_rows = min(tile_rows, rows_floor)

    grid = (pl.cdiv(rows, tile_rows),)  # ragged last block handled by Pallas

    out2d = pl.pallas_call(
        _copy_kernel,
        out_shape=jax.ShapeDtypeStruct((rows, lanes), dtype),
        grid=grid,
        in_specs=[pl.BlockSpec((tile_rows, lanes), lambda i: (i, 0))],
        out_specs=pl.BlockSpec((tile_rows, lanes), lambda i: (i, 0)),
        compiler_params=pltpu.CompilerParams(
            dimension_semantics=_grid_semantics()),
        cost_estimate=pl.CostEstimate(
            flops=0, transcendentals=0,
            bytes_accessed=2 * rows * lanes * itemsize),
    )(x2d)

    out = out2d.reshape(-1)
    if padded_total != total:
        out = out[:total]
    return out.reshape(shape)


def optimal_transport_forward(x: jax.Array, *, force_kernel: bool = False) -> jax.Array:
    """Forward pass of the (parameter-free, no-op) `OptimalTransport` module.

    The reference forward body is `pass`, so the only meaningful semantics is
    a pass-through of `x`.  By default this returns `x` untouched (zero bytes
    moved).  `force_kernel=True` forces the data through a Pallas TPU copy
    kernel into a fresh buffer (testing / benchmarking only).
    """
    if not force_kernel:
        return x
    return _pallas_identity(x)


if __name__ == "__main__":
    key = jax.random.PRNGKey(0)
    # Small NCHW input consistent with a conv-style module: [B=2, C=4, H=16, W=16]
    x = jax.random.normal(key, (2, 4, 16, 16), dtype=jnp.float32)

    # Default (optimal) path: pure pass-through, zero HBM traffic.
    y_fast = optimal_transport_forward(x)
    assert y_fast is x

    # Forced-kernel path: small input -> single whole-array Pallas block.
    y = optimal_transport_forward(x, force_kernel=True)
    y = jax.block_until_ready(y)
    assert y.shape == x.shape and y.dtype == x.dtype
    assert jnp.allclose(y, x), "identity kernel mismatch (small path)"

    # Exercise the tiled / pipelined path as well (8 MiB, lane width 1024).
    x2 = jax.random.normal(jax.random.PRNGKey(0), (2048, 1024), dtype=jnp.float32)
    y2 = jax.block_until_ready(optimal_transport_forward(x2, force_kernel=True))
    assert jnp.allclose(y2, x2), "identity kernel mismatch (tiled path)"

    print("KERNEL_OK")
</pallas_src>

<mosaic_0001>
module attributes {stable_mosaic.version = 11 : i64} {
  func.func @_copy_kernel(%arg0: memref<16x128xf32, #tpu.memory_space<vmem>>, %arg1: memref<16x128xf32, #tpu.memory_space<vmem>>) attributes {dimension_semantics = [], scalar_prefetch = 0 : i64, scratch_operands = 0 : i64, tpu.core_type = #tpu.core_type<tc>} {
    %c0 = arith.constant 0 : index
    %c0_0 = arith.constant 0 : index
    %0 = vector.load %arg0[%c0, %c0_0] : memref<16x128xf32, #tpu.memory_space<vmem>>, vector<16x128xf32>
    %c0_1 = arith.constant 0 : index
    %c0_2 = arith.constant 0 : index
    %1 = vector.load %arg1[%c0_1, %c0_2] : memref<16x128xf32, #tpu.memory_space<vmem>>, vector<16x128xf32>
    tpu.vector_store %arg1[%c0_1, %c0_2], %0 {strides = array<i32>} : memref<16x128xf32, #tpu.memory_space<vmem>>, vector<16x128xf32>,
    return
  }
}

</mosaic_0001>

<llo_original>
// kernel: _pallas_identity.1
$region0: #{_pallas_identity.1}
  #allocation0 [shape = 'u32[]', space=smem, size = 0x4, offset = 0x4, fixed_abs, tag = 'smem constant byte address 0x4 - core index']
  #allocation1 [shape = 'u32[72,128]{1,0:T(1,128)}', space=vmem, size = 0x9000, scoped, tag = 'internal scratch']
  %s0 = inlined_call_operand.vmem [shape: f32[16,128], index: 0, kind: input, shape index: {}]
  %s1 = inlined_call_operand.vmem [shape: f32[16,128], index: 1, kind: output, shape index: {}]
  %s2 = sld [smem:[#allocation0]]
  $region14: #{_pallas_identity.1} parent=0
    _
  %s4 = ssub.s32 1, %s2
  %s5 = scalar_select 0, %s4, %s2
  // Predicated region
  $region2: #{_pallas_identity.1} parent=0 // pred_check
    _
  $region3: #{_pallas_identity.1} parent=0 // pred_check_branch
    %7 = sbr.rel (0) target = $region5
  $region4: #{_pallas_identity.1} parent=0 // pred_region
    _
  $region5: #{_pallas_identity.1} parent=0 // pred_fallthru
    _
  %v8 = vld [vmem:[%s0] sm:$0xff]
  %v9 = vld [vmem:[%s0 + $0x8] sm:$0xff]
  %10 = vst [vmem:[%s1] sm:$0xff] %v8
  %11 = vst [vmem:[%s1 + $0x8] sm:$0xff] %v9
  // Predicated region
  $region6: #{_pallas_identity.1} parent=0 // pred_check
    _
  $region7: #{_pallas_identity.1} parent=0 // pred_check_branch
    %13 = sbr.rel (0) target = $region9
  $region8: #{_pallas_identity.1} parent=0 // pred_region
    _
  $region9: #{_pallas_identity.1} parent=0 // pred_fallthru
    _
  // Predicated region
  $region10: #{_pallas_identity.1} parent=0 // pred_check
    _
  $region11: #{_pallas_identity.1} parent=0 // pred_check_branch
    %15 = sbr.rel (0) target = $region13
  $region12: #{_pallas_identity.1} parent=0 // pred_region
    _
  $region13: #{_pallas_identity.1} parent=0 // pred_fallthru
    _

</llo_original>
